<compile_context>
chip_gen: v7x
topology: tpu7x:2x2x1
jax: 0.10.0
libtpu: 0.0.40
codegen_flags: <defaults>
</compile_context>

<pallas_src>
import functools

import jax
import jax.numpy as jnp
from jax.experimental import pallas as pl
from jax.experimental.pallas import tpu as pltpu


def _round_up(x, m):
    return ((x + m - 1) // m) * m


def regressor_head_kernel(x_ref, w1_ref, b1_ref, g_ref, beta_ref, w2_ref, b2_ref,
                          o_ref, acc_ref, *, inv_seq_len):
    # x_ref: [TB, TS, H] activation tile in its native dtype.
    sj = pl.program_id(1)

    @pl.when(sj == 0)
    def _():
        acc_ref[...] = jnp.zeros_like(acc_ref)

    # ---- partial mean pooling over the sequence dimension (accumulate in f32) ----
    acc_ref[...] += jnp.sum(x_ref[...], axis=1, dtype=jnp.float32)          # [TB, H]

    @pl.when(sj == pl.num_programs(1) - 1)
    def _():
        pooled = acc_ref[...] * inv_seq_len                                  # [TB, H]

        # ---- Linear(H, H) ----
        h = jnp.dot(pooled, w1_ref[...].astype(jnp.float32),
                    preferred_element_type=jnp.float32)
        h = h + b1_ref[...].astype(jnp.float32)                              # [TB, H]

        # ---- LayerNorm(H), eps = 1e-5 (torch default), elementwise affine ----
        mu = jnp.mean(h, axis=-1, keepdims=True)
        var = jnp.mean((h - mu) * (h - mu), axis=-1, keepdims=True)
        h = (h - mu) * jax.lax.rsqrt(var + 1e-5)
        h = h * g_ref[...].astype(jnp.float32) + beta_ref[...].astype(jnp.float32)

        # ---- GELU (exact erf form, nn.GELU default; keeps PyTorch parity) ----
        h = 0.5 * h * (1.0 + jax.lax.erf(h * 0.7071067811865476))

        # ---- Linear(H, num_labels_padded) ----
        out = jnp.dot(h, w2_ref[...].astype(jnp.float32),
                      preferred_element_type=jnp.float32)
        out = out + b2_ref[...].astype(jnp.float32)                          # [TB, Lp]
        o_ref[...] = out.astype(o_ref.dtype)


def regressor_head(last_hidden_state, w1, b1, gamma, beta, w2, b2,
                   *, tb=None, ts=None, vmem_budget_bytes=4 * 1024 * 1024):
    """last_hidden_state: [B, S, H] -> logits [B, num_labels]."""
    B, S, H = last_hidden_state.shape
    L = w2.shape[1]

    # ---- lane-dense output: pad num_labels up to a multiple of 128 ----
    L_pad = max(_round_up(L, 128), 128)
    if L_pad != L:
        w2_p = jnp.zeros((H, L_pad), dtype=w2.dtype).at[:, :L].set(w2)
        b2_p = jnp.zeros((L_pad,), dtype=b2.dtype).at[:L].set(b2)
    else:
        w2_p, b2_p = w2, b2

    itemsize = jnp.dtype(last_hidden_state.dtype).itemsize

    # ---- sequence tile: multiple of 8, capped so each DMA slab stays small ----
    S8 = _round_up(S, 8)
    if ts is None:
        ts = min(S8, 128)
    ts = max(8, _round_up(ts, 8))
    ts = min(ts, S8)

    # ---- batch tile: multiple of 8, double-buffered x tile within VMEM budget ----
    if tb is None:
        blk_row_bytes = max(ts * H * itemsize, 1)
        tb = (vmem_budget_bytes // blk_row_bytes) // 8 * 8
        tb = max(8, min(256, tb))
    tb = max(8, (tb // 8) * 8)
    tb = min(tb, _round_up(B, 8))

    S_pad = _round_up(S, ts)
    B_pad = _round_up(B, tb)
    if (B_pad, S_pad) != (B, S):
        # Zero padding on the sequence axis is harmless: sums are unaffected and
        # we divide by the true S. Padded batch rows are sliced off at the end.
        x = jnp.zeros((B_pad, S_pad, H), dtype=last_hidden_state.dtype)
        x = x.at[:B, :S].set(last_hidden_state)
    else:
        x = last_hidden_state

    grid = (B_pad // tb, S_pad // ts)
    kernel = functools.partial(regressor_head_kernel, inv_seq_len=1.0 / S)

    out = pl.pallas_call(
        kernel,
        out_shape=jax.ShapeDtypeStruct((B_pad, L_pad), jnp.float32),
        grid=grid,
        in_specs=[
            pl.BlockSpec((tb, ts, H), lambda i, j: (i, j, 0)),   # x: streamed tiles
            pl.BlockSpec((H, H), lambda i, j: (0, 0)),           # W1: resident
            pl.BlockSpec((1, H), lambda i, j: (0, 0)),           # b1
            pl.BlockSpec((1, H), lambda i, j: (0, 0)),           # gamma
            pl.BlockSpec((1, H), lambda i, j: (0, 0)),           # beta
            pl.BlockSpec((H, L_pad), lambda i, j: (0, 0)),       # W2 (padded)
            pl.BlockSpec((1, L_pad), lambda i, j: (0, 0)),       # b2 (padded)
        ],
        out_specs=pl.BlockSpec((tb, L_pad), lambda i, j: (i, 0)),
        scratch_shapes=[pltpu.VMEM((tb, H), jnp.float32)],        # pooled-sum acc
        compiler_params=pltpu.CompilerParams(
            dimension_semantics=("parallel", "arbitrary")),       # megacore on v7x
    )(x, w1, b1.reshape(1, H), gamma.reshape(1, H), beta.reshape(1, H),
      w2_p, b2_p.reshape(1, L_pad))

    return out[:B, :L]


def reference_head(x, w1, b1, gamma, beta, w2, b2):
    pooled = jnp.mean(x.astype(jnp.float32), axis=1)
    h = pooled @ w1 + b1
    mu = jnp.mean(h, axis=-1, keepdims=True)
    var = jnp.mean((h - mu) ** 2, axis=-1, keepdims=True)
    h = (h - mu) / jnp.sqrt(var + 1e-5) * gamma + beta
    h = jax.nn.gelu(h, approximate=False)
    return h @ w2 + b2


if __name__ == "__main__":
    # Small synthetic shapes consistent with the module:
    #   hidden_size * num_images -> H_eff; here H_eff = 32, seq = 8, batch = 2,
    #   num_labels = 4.
    B, S, H, L = 2, 8, 32, 4

    key = jax.random.PRNGKey(0)
    k_x, k_w1, k_b1, k_w2, k_b2 = jax.random.split(key, 5)

    # Deterministic parameter init (synthetic, not a checkpoint load).
    x = jax.random.normal(k_x, (B, S, H), dtype=jnp.float32)
    w1 = jax.random.normal(k_w1, (H, H), dtype=jnp.float32) * 0.05
    b1 = jax.random.normal(k_b1, (H,), dtype=jnp.float32) * 0.01
    gamma = jnp.ones((H,), dtype=jnp.float32)
    beta = jnp.zeros((H,), dtype=jnp.float32)
    w2 = jax.random.normal(k_w2, (H, L), dtype=jnp.float32) * 0.05
    b2 = jax.random.normal(k_b2, (L,), dtype=jnp.float32) * 0.01

    out = regressor_head(x, w1, b1, gamma, beta, w2, b2)
    out = jax.block_until_ready(out)

    ref = reference_head(x, w1, b1, gamma, beta, w2, b2)
    assert out.shape == (B, L), out.shape
    assert jnp.allclose(out, ref, atol=1e-4, rtol=1e-4), (out, ref)

    print("KERNEL_OK")
</pallas_src>

<mosaic_0001>
module attributes {stable_mosaic.version = 11 : i64} {
  func.func @regressor_head_kernel(%arg0: i32, %arg1: i32, %arg2: memref<8x8x32xf32, #tpu.memory_space<vmem>>, %arg3: memref<32x32xf32, #tpu.memory_space<vmem>>, %arg4: memref<1x32xf32, #tpu.memory_space<vmem>>, %arg5: memref<1x32xf32, #tpu.memory_space<vmem>>, %arg6: memref<1x32xf32, #tpu.memory_space<vmem>>, %arg7: memref<32x128xf32, #tpu.memory_space<vmem>>, %arg8: memref<1x128xf32, #tpu.memory_space<vmem>>, %arg9: memref<8x128xf32, #tpu.memory_space<vmem>>, %arg10: memref<8x32xf32, #tpu.memory_space<vmem>>) attributes {dimension_semantics = [#tpu.dimension_semantics<parallel>, #tpu.dimension_semantics<arbitrary>], iteration_bounds = array<i64: 1, 1>, scalar_prefetch = 0 : i64, scratch_operands = 1 : i64, tpu.core_type = #tpu.core_type<tc>, window_params = [{transform_indices = @transform_0, window_bounds = array<i64: 8, 8, 32>}, {pipeline_mode = #tpu.pipeline_mode<synchronous>, transform_indices = @transform_1, window_bounds = array<i64: 32, 32>}, {pipeline_mode = #tpu.pipeline_mode<synchronous>, transform_indices = @transform_2, window_bounds = array<i64: 1, 32>}, {pipeline_mode = #tpu.pipeline_mode<synchronous>, transform_indices = @transform_3, window_bounds = array<i64: 1, 32>}, {pipeline_mode = #tpu.pipeline_mode<synchronous>, transform_indices = @transform_4, window_bounds = array<i64: 1, 32>}, {pipeline_mode = #tpu.pipeline_mode<synchronous>, transform_indices = @transform_5, window_bounds = array<i64: 32, 128>}, {pipeline_mode = #tpu.pipeline_mode<synchronous>, transform_indices = @transform_6, window_bounds = array<i64: 1, 128>}, {transform_indices = @transform_7, window_bounds = array<i64: 8, 128>}]} {
    %c0_i32 = arith.constant 0 : i32
    %0 = arith.cmpi eq, %arg1, %c0_i32 : i32
    %1 = arith.extui %0 : i1 to i32
    %c0_i32_0 = arith.constant 0 : i32
    %2 = arith.cmpi ne, %1, %c0_i32_0 : i32
    scf.if %2 {
      %cst_9 = arith.constant 0.000000e+00 : f32
      %11 = vector.broadcast %cst_9 : f32 to vector<8x32xf32>
      %c0_10 = arith.constant 0 : index
      %c0_11 = arith.constant 0 : index
      %12 = vector.load %arg10[%c0_10, %c0_11] : memref<8x32xf32, #tpu.memory_space<vmem>>, vector<8x32xf32>
      tpu.vector_store %arg10[%c0_10, %c0_11], %11 {strides = array<i32>} : memref<8x32xf32, #tpu.memory_space<vmem>>, vector<8x32xf32>,
    } else {
    }
    %c0 = arith.constant 0 : index
    %c0_1 = arith.constant 0 : index
    %3 = vector.load %arg10[%c0, %c0_1] : memref<8x32xf32, #tpu.memory_space<vmem>>, vector<8x32xf32>
    %c0_2 = arith.constant 0 : index
    %c0_3 = arith.constant 0 : index
    %c0_4 = arith.constant 0 : index
    %4 = vector.load %arg2[%c0_2, %c0_3, %c0_4] : memref<8x8x32xf32, #tpu.memory_space<vmem>>, vector<8x8x32xf32>
    %cst = arith.constant dense<0.000000e+00> : vector<8x32xf32>
    %5 = vector.multi_reduction <add>, %4, %cst [1] : vector<8x8x32xf32> to vector<8x32xf32>
    %6 = arith.addf %3, %5 : vector<8x32xf32>
    %c0_5 = arith.constant 0 : index
    %c0_6 = arith.constant 0 : index
    %7 = vector.load %arg10[%c0_5, %c0_6] : memref<8x32xf32, #tpu.memory_space<vmem>>, vector<8x32xf32>
    tpu.vector_store %arg10[%c0_5, %c0_6], %6 {strides = array<i32>} : memref<8x32xf32, #tpu.memory_space<vmem>>, vector<8x32xf32>,
    %c0_i32_7 = arith.constant 0 : i32
    %8 = arith.cmpi eq, %arg1, %c0_i32_7 : i32
    %9 = arith.extui %8 : i1 to i32
    %c0_i32_8 = arith.constant 0 : i32
    %10 = arith.cmpi ne, %9, %c0_i32_8 : i32
    scf.if %10 {
      %c0_9 = arith.constant 0 : index
      %c0_10 = arith.constant 0 : index
      %11 = vector.load %arg10[%c0_9, %c0_10] : memref<8x32xf32, #tpu.memory_space<vmem>>, vector<8x32xf32>
      %cst_11 = arith.constant 1.250000e-01 : f32
      %12 = vector.broadcast %cst_11 : f32 to vector<8x32xf32>
      %13 = arith.mulf %11, %12 : vector<8x32xf32>
      %c0_12 = arith.constant 0 : index
      %c0_13 = arith.constant 0 : index
      %14 = vector.load %arg3[%c0_12, %c0_13] : memref<32x32xf32, #tpu.memory_space<vmem>>, vector<32x32xf32>
      %cst_14 = arith.constant dense<0.000000e+00> : vector<8x32xf32>
      %15 = tpu.matmul %13, %14, %cst_14 {dimension_numbers = #tpu.dot_dimension_numbers<[1], [0], [0], [1], [0, 0, 1, 1], [], []>} : vector<8x32xf32>, vector<32x32xf32>, vector<8x32xf32> -> vector<8x32xf32>
      %c0_15 = arith.constant 0 : index
      %c0_16 = arith.constant 0 : index
      %16 = vector.load %arg4[%c0_15, %c0_16] : memref<1x32xf32, #tpu.memory_space<vmem>>, vector<1x32xf32>
      %17 = vector.broadcast %16 : vector<1x32xf32> to vector<8x32xf32>
      %18 = arith.addf %15, %17 : vector<8x32xf32>
      %cst_17 = arith.constant dense<0.000000e+00> : vector<8xf32>
      %19 = vector.multi_reduction <add>, %18, %cst_17 [1] : vector<8x32xf32> to vector<8xf32>
      %20 = vector.shape_cast %19 : vector<8xf32> to vector<8x1xf32>
      %cst_18 = arith.constant 3.200000e+01 : f32
      %21 = vector.broadcast %cst_18 : f32 to vector<8x1xf32>
      %22 = arith.divf %20, %21 : vector<8x1xf32>
      %23 = vector.broadcast %22 : vector<8x1xf32> to vector<8x32xf32>
      %24 = arith.subf %18, %23 : vector<8x32xf32>
      %25 = vector.broadcast %22 : vector<8x1xf32> to vector<8x32xf32>
      %26 = arith.subf %18, %25 : vector<8x32xf32>
      %27 = arith.mulf %24, %26 : vector<8x32xf32>
      %cst_19 = arith.constant dense<0.000000e+00> : vector<8xf32>
      %28 = vector.multi_reduction <add>, %27, %cst_19 [1] : vector<8x32xf32> to vector<8xf32>
      %29 = vector.shape_cast %28 : vector<8xf32> to vector<8x1xf32>
      %cst_20 = arith.constant 3.200000e+01 : f32
      %30 = vector.broadcast %cst_20 : f32 to vector<8x1xf32>
      %31 = arith.divf %29, %30 : vector<8x1xf32>
      %32 = vector.broadcast %22 : vector<8x1xf32> to vector<8x32xf32>
      %33 = arith.subf %18, %32 : vector<8x32xf32>
      %cst_21 = arith.constant 9.99999974E-6 : f32
      %34 = vector.broadcast %cst_21 : f32 to vector<8x1xf32>
      %35 = arith.addf %31, %34 : vector<8x1xf32>
      %36 = math.rsqrt %35 : vector<8x1xf32>
      %37 = vector.broadcast %36 : vector<8x1xf32> to vector<8x32xf32>
      %38 = arith.mulf %33, %37 : vector<8x32xf32>
      %c0_22 = arith.constant 0 : index
      %c0_23 = arith.constant 0 : index
      %39 = vector.load %arg5[%c0_22, %c0_23] : memref<1x32xf32, #tpu.memory_space<vmem>>, vector<1x32xf32>
      %40 = vector.broadcast %39 : vector<1x32xf32> to vector<8x32xf32>
      %41 = arith.mulf %38, %40 : vector<8x32xf32>
      %c0_24 = arith.constant 0 : index
      %c0_25 = arith.constant 0 : index
      %42 = vector.load %arg6[%c0_24, %c0_25] : memref<1x32xf32, #tpu.memory_space<vmem>>, vector<1x32xf32>
      %43 = vector.broadcast %42 : vector<1x32xf32> to vector<8x32xf32>
      %44 = arith.addf %41, %43 : vector<8x32xf32>
      %cst_26 = arith.constant 5.000000e-01 : f32
      %45 = vector.broadcast %cst_26 : f32 to vector<8x32xf32>
      %46 = arith.mulf %45, %44 : vector<8x32xf32>
      %cst_27 = arith.constant 0.707106769 : f32
      %47 = vector.broadcast %cst_27 : f32 to vector<8x32xf32>
      %48 = arith.mulf %44, %47 : vector<8x32xf32>
      %49 = math.erf %48 : vector<8x32xf32>
      %cst_28 = arith.constant 1.000000e+00 : f32
      %50 = vector.broadcast %cst_28 : f32 to vector<8x32xf32>
      %51 = arith.addf %50, %49 : vector<8x32xf32>
      %52 = arith.mulf %46, %51 : vector<8x32xf32>
      %c0_29 = arith.constant 0 : index
      %c0_30 = arith.constant 0 : index
      %53 = vector.load %arg7[%c0_29, %c0_30] : memref<32x128xf32, #tpu.memory_space<vmem>>, vector<32x128xf32>
      %cst_31 = arith.constant dense<0.000000e+00> : vector<8x128xf32>
      %54 = tpu.matmul %52, %53, %cst_31 {dimension_numbers = #tpu.dot_dimension_numbers<[1], [0], [0], [1], [0, 0, 1, 1], [], []>} : vector<8x32xf32>, vector<32x128xf32>, vector<8x128xf32> -> vector<8x128xf32>
      %c0_32 = arith.constant 0 : index
      %c0_33 = arith.constant 0 : index
      %55 = vector.load %arg8[%c0_32, %c0_33] : memref<1x128xf32, #tpu.memory_space<vmem>>, vector<1x128xf32>
      %56 = vector.broadcast %55 : vector<1x128xf32> to vector<8x128xf32>
      %57 = arith.addf %54, %56 : vector<8x128xf32>
      %c0_34 = arith.constant 0 : index
      %c0_35 = arith.constant 0 : index
      %58 = vector.load %arg9[%c0_34, %c0_35] : memref<8x128xf32, #tpu.memory_space<vmem>>, vector<8x128xf32>
      tpu.vector_store %arg9[%c0_34, %c0_35], %57 {strides = array<i32>} : memref<8x128xf32, #tpu.memory_space<vmem>>, vector<8x128xf32>,
    } else {
    }
    return
  }
  func.func @transform_0(%arg0: i32, %arg1: i32) -> (i32, i32, i32) {
    %c0_i32 = arith.constant 0 : i32
    %c0_i32_0 = arith.constant 0 : i32
    return %arg0, %arg1, %c0_i32 : i32, i32, i32
  }
  func.func @transform_1(%arg0: i32, %arg1: i32) -> (i32, i32) {
    %c0_i32 = arith.constant 0 : i32
    %c0_i32_0 = arith.constant 0 : i32
    %c0_i32_1 = arith.constant 0 : i32
    return %c0_i32, %c0_i32_0 : i32, i32
  }
  func.func @transform_2(%arg0: i32, %arg1: i32) -> (i32, i32) {
    %c0_i32 = arith.constant 0 : i32
    %c0_i32_0 = arith.constant 0 : i32
    %c0_i32_1 = arith.constant 0 : i32
    return %c0_i32, %c0_i32_0 : i32, i32
  }
  func.func @transform_3(%arg0: i32, %arg1: i32) -> (i32, i32) {
    %c0_i32 = arith.constant 0 : i32
    %c0_i32_0 = arith.constant 0 : i32
    %c0_i32_1 = arith.constant 0 : i32
    return %c0_i32, %c0_i32_0 : i32, i32
  }
  func.func @transform_4(%arg0: i32, %arg1: i32) -> (i32, i32) {
    %c0_i32 = arith.constant 0 : i32
    %c0_i32_0 = arith.constant 0 : i32
    %c0_i32_1 = arith.constant 0 : i32
    return %c0_i32, %c0_i32_0 : i32, i32
  }
  func.func @transform_5(%arg0: i32, %arg1: i32) -> (i32, i32) {
    %c0_i32 = arith.constant 0 : i32
    %c0_i32_0 = arith.constant 0 : i32
    %c0_i32_1 = arith.constant 0 : i32
    return %c0_i32, %c0_i32_0 : i32, i32
  }
  func.func @transform_6(%arg0: i32, %arg1: i32) -> (i32, i32) {
    %c0_i32 = arith.constant 0 : i32
    %c0_i32_0 = arith.constant 0 : i32
    %c0_i32_1 = arith.constant 0 : i32
    return %c0_i32, %c0_i32_0 : i32, i32
  }
  func.func @transform_7(%arg0: i32, %arg1: i32) -> (i32, i32) {
    %c0_i32 = arith.constant 0 : i32
    %c0_i32_0 = arith.constant 0 : i32
    return %arg0, %c0_i32 : i32, i32
  }
}

</mosaic_0001>

<llo_original>
// kernel: tpu_custom_call.1
$region0: #{tpu_custom_call.1}
  #allocation0 [shape = 'u32[]', space=smem, size = 0x4, offset = 0x4, fixed_abs, tag = 'smem constant byte address 0x4 - core index']
  #allocation1 [shape = 'u32[144,128]{1,0:T(1,128)}', space=vmem, size = 0x12000, scoped, tag = 'internal scratch']
  #allocation2 [shape = 'f32[8,32]{1,0:T(8,128)}', space=vmem, size = 0x1000, scoped, tag = 'scratch operand']
  %s0 = inlined_call_operand.hbm [shape: f32[8,8,32], index: 0, kind: input, shape index: {}]
  %s1 = inlined_call_operand.hbm [shape: f32[32,32], index: 1, kind: input, shape index: {}]
  %s2 = inlined_call_operand.vmem [shape: f32[1,32], index: 2, kind: input, shape index: {}]
  %s3 = inlined_call_operand.vmem [shape: f32[1,32], index: 3, kind: input, shape index: {}]
  %s4 = inlined_call_operand.vmem [shape: f32[1,32], index: 4, kind: input, shape index: {}]
  %s5 = inlined_call_operand.hbm [shape: f32[32,128], index: 5, kind: input, shape index: {}]
  %s6 = inlined_call_operand.vmem [shape: f32[1,128], index: 6, kind: input, shape index: {}]
  %s7 = inlined_call_operand.hbm [shape: f32[8,128], index: 7, kind: output, shape index: {}]
  %s8 = sld [smem:[#allocation0]]
  $region58: #{tpu_custom_call.1} parent=0
    _
  %s10 = ssub.s32 1, %s8
  %s11 = scalar_select 0, %s10, %s8
  $region1: #{tpu_custom_call.1} parent=0
    #allocation3 [shape = 'u8[32768]{0}', space=vmem, size = 0x8000, scoped, tag = 'input window, operand 0, single buffered']
    #allocation4 [shape = 's32[1]{0}', space=sflag, size = 0x4, scoped, tag = 'scoped memory for tpu_custom_call.1']
    #allocation5 [shape = 's32[1]{0}', space=sflag, size = 0x4, scoped, tag = 'scoped memory for tpu_custom_call.1']
    #allocation6 [shape = 'u8[16384]{0}', space=vmem, size = 0x4000, scoped, tag = 'input window, operand 1, single buffered']
    #allocation7 [shape = 's32[1]{0}', space=sflag, size = 0x4, scoped, tag = 'scoped memory for tpu_custom_call.1']
    #allocation8 [shape = 'u8[16384]{0}', space=vmem, size = 0x4000, scoped, tag = 'input window, operand 5, single buffered']
    #allocation9 [shape = 'u8[4096]{0}', space=vmem, size = 0x1000, scoped, tag = 'output window, operand 0, single buffered']
    %12 = vsyncpa [#allocation4], 0
    %13 = vsyncpa [#allocation7], 0
    %14 = vsyncpa [#allocation5], 0
    // Predicated region
    $region2: #{tpu_custom_call.1} parent=1 // pred_check
      _
    $region3: #{tpu_custom_call.1} parent=1 // pred_check_branch
      %16 = sbr.rel (0) target = $region5
    $region4: #{tpu_custom_call.1} parent=1 // pred_region
      %s18 = ssub.s32 1024, 1024
      %19 = vsyncadd [#allocation4], %s18
      %s20 = sshll.u32 [#allocation3], 4
      %s21 = int_to_ptr.vmem [resolvable:$true] %s20
      %26 = dma.hbm_to_vmem [thread:$0]  %s0, 1024, %s21, [#allocation4], 128, 128, 8
    $region5: #{tpu_custom_call.1} parent=1 // pred_fallthru
      _
    // Predicated region
    $region6: #{tpu_custom_call.1} parent=1 // pred_check
      _
    $region7: #{tpu_custom_call.1} parent=1 // pred_check_branch
      %28 = sbr.rel (0) target = $region9
    $region8: #{tpu_custom_call.1} parent=1 // pred_region
      %s30 = ssub.s32 512, 512
      %31 = vsyncadd [#allocation7], %s30
      %s32 = sshll.u32 [#allocation6], 4
      %s33 = int_to_ptr.vmem [resolvable:$true] %s32
      %38 = dma.hbm_to_vmem [thread:$0]  %s1, 512, %s33, [#allocation7], 128, 128, 8
    $region9: #{tpu_custom_call.1} parent=1 // pred_fallthru
      _
    // Predicated region
    $region10: #{tpu_custom_call.1} parent=1 // pred_check
      _
    $region11: #{tpu_custom_call.1} parent=1 // pred_check_branch
      %40 = sbr.rel (0) target = $region13
    $region12: #{tpu_custom_call.1} parent=1 // pred_region
      _
    $region13: #{tpu_custom_call.1} parent=1 // pred_fallthru
      _
    // Predicated region
    $region14: #{tpu_custom_call.1} parent=1 // pred_check
      _
    $region15: #{tpu_custom_call.1} parent=1 // pred_check_branch
      %42 = sbr.rel (0) target = $region17
    $region16: #{tpu_custom_call.1} parent=1 // pred_region
      _
    $region17: #{tpu_custom_call.1} parent=1 // pred_fallthru
      _
    // Predicated region
    $region18: #{tpu_custom_call.1} parent=1 // pred_check
      _
    $region19: #{tpu_custom_call.1} parent=1 // pred_check_branch
      %44 = sbr.rel (0) target = $region21
    $region20: #{tpu_custom_call.1} parent=1 // pred_region
      _
    $region21: #{tpu_custom_call.1} parent=1 // pred_fallthru
      _
    // Predicated region
    $region22: #{tpu_custom_call.1} parent=1 // pred_check
      _
    $region23: #{tpu_custom_call.1} parent=1 // pred_check_branch
      %46 = sbr.rel (0) target = $region25
    $region24: #{tpu_custom_call.1} parent=1 // pred_region
      %s48 = ssub.s32 512, 512
      %49 = vsyncadd [#allocation7], %s48
      %s50 = sshll.u32 [#allocation8], 4
      %s51 = int_to_ptr.vmem [resolvable:$true] %s50
      %56 = dma.hbm_to_vmem [thread:$0]  %s5, 512, %s51, [#allocation7], 128, 128, 8
    $region25: #{tpu_custom_call.1} parent=1 // pred_fallthru
      _
    // Predicated region
    $region26: #{tpu_custom_call.1} parent=1 // pred_check
      _
    $region27: #{tpu_custom_call.1} parent=1 // pred_check_branch
      %58 = sbr.rel (0) target = $region29
    $region28: #{tpu_custom_call.1} parent=1 // pred_region
      _
    $region29: #{tpu_custom_call.1} parent=1 // pred_fallthru
      _
    // Predicated region
    $region30: #{tpu_custom_call.1} parent=1 // pred_check
      _
    $region31: #{tpu_custom_call.1} parent=1 // pred_check_branch
      %60 = sbr.rel (0) target = $region33
    $region32: #{tpu_custom_call.1} parent=1 // pred_region
      %61 = dma.done [#allocation4], 1024
    $region33: #{tpu_custom_call.1} parent=1 // pred_fallthru
      _
    // Predicated region
    $region34: #{tpu_custom_call.1} parent=1 // pred_check
      _
    $region35: #{tpu_custom_call.1} parent=1 // pred_check_branch
      %63 = sbr.rel (0) target = $region37
    $region36: #{tpu_custom_call.1} parent=1 // pred_region
      %64 = dma.done [#allocation7], 512
    $region37: #{tpu_custom_call.1} parent=1 // pred_fallthru
      _
    // Predicated region
    $region38: #{tpu_custom_call.1} parent=1 // pred_check
      _
    $region39: #{tpu_custom_call.1} parent=1 // pred_check_branch
      %66 = sbr.rel (0) target = $region41
    $region40: #{tpu_custom_call.1} parent=1 // pred_region
      %67 = dma.done [#allocation7], 512
    $region41: #{tpu_custom_call.1} parent=1 // pred_fallthru
      _
    %p68 = scmp.eq.s32.totalorder 0, 0
    // Predicated region
    $region42: #{tpu_custom_call.1} parent=1 // pred_check
      %p69 = pneg %p68
    $region43: #{tpu_custom_call.1} parent=1 // pred_check_branch
      %71 = sbr.rel (%p69) target = $region45
    $region44: #{tpu_custom_call.1} parent=1 // pred_region
      %vm72 = vcmask 261120
      %73 = vst.msk [vmem:[#allocation2] sm:$0xff] %vm72, 0.0
    $region45: #{tpu_custom_call.1} parent=1 // pred_fallthru
      _
    %v74 = vld [vmem:[#allocation2] sm:$0xff]
    %v75 = vld [vmem:[#allocation3] sm:$0xff]
    %v76 = vld [vmem:[#allocation3 + $0x8] sm:$0xff]
    %v77 = vld [vmem:[#allocation3 + $0x10] sm:$0xff]
    %v78 = vld [vmem:[#allocation3 + $0x18] sm:$0xff]
    %v79 = vld [vmem:[#allocation3 + $0x20] sm:$0xff]
    %v80 = vld [vmem:[#allocation3 + $0x28] sm:$0xff]
    %v81 = vld [vmem:[#allocation3 + $0x30] sm:$0xff]
    %v82 = vld [vmem:[#allocation3 + $0x38] sm:$0xff]
    %vm83 = vcmask 261120
    %v84 = vsel %vm83, %v75, 0.0
    %v85 = vrot.slane %v84, 4
    %v86 = vadd.f32 %v84, %v85
    %v87 = vrot.slane %v86, 2
    %v88 = vadd.f32 %v86, %v87
    %v89 = vrot.slane %v88, 1
    %v90 = vadd.f32 %v88, %v89
    %v91 = vsel %vm83, %v76, 0.0
    %v92 = vrot.slane %v91, 4
    %v93 = vadd.f32 %v91, %v92
    %v94 = vrot.slane %v93, 2
    %v95 = vadd.f32 %v93, %v94
    %v96 = vrot.slane %v95, 1
    %v97 = vadd.f32 %v95, %v96
    %v98 = vsel %vm83, %v77, 0.0
    %v99 = vrot.slane %v98, 4
    %v100 = vadd.f32 %v98, %v99
    %v101 = vrot.slane %v100, 2
    %v102 = vadd.f32 %v100, %v101
    %v103 = vrot.slane %v102, 1
    %v104 = vadd.f32 %v102, %v103
    %v105 = vsel %vm83, %v78, 0.0
    %v106 = vrot.slane %v105, 4
    %v107 = vadd.f32 %v105, %v106
    %v108 = vrot.slane %v107, 2
    %v109 = vadd.f32 %v107, %v108
    %v110 = vrot.slane %v109, 1
    %v111 = vadd.f32 %v109, %v110
    %v112 = vsel %vm83, %v79, 0.0
    %v113 = vrot.slane %v112, 4
    %v114 = vadd.f32 %v112, %v113
    %v115 = vrot.slane %v114, 2
    %v116 = vadd.f32 %v114, %v115
    %v117 = vrot.slane %v116, 1
    %v118 = vadd.f32 %v116, %v117
    %v119 = vsel %vm83, %v80, 0.0
    %v120 = vrot.slane %v119, 4
    %v121 = vadd.f32 %v119, %v120
    %v122 = vrot.slane %v121, 2
    %v123 = vadd.f32 %v121, %v122
    %v124 = vrot.slane %v123, 1
    %v125 = vadd.f32 %v123, %v124
    %v126 = vsel %vm83, %v81, 0.0
    %v127 = vrot.slane %v126, 4
    %v128 = vadd.f32 %v126, %v127
    %v129 = vrot.slane %v128, 2
    %v130 = vadd.f32 %v128, %v129
    %v131 = vrot.slane %v130, 1
    %v132 = vadd.f32 %v130, %v131
    %v133 = vsel %vm83, %v82, 0.0
    %v134 = vrot.slane %v133, 4
    %v135 = vadd.f32 %v133, %v134
    %v136 = vrot.slane %v135, 2
    %v137 = vadd.f32 %v135, %v136
    %v138 = vrot.slane %v137, 1
    %v139 = vadd.f32 %v137, %v138
    %vm148 = vcmask 1041409
    %v149 = vsel %vm148, %v97, %v90
    %vm150 = vcmask 1042434
    %v151 = vsel %vm150, %v104, %v149
    %vm152 = vcmask 1043459
    %v153 = vsel %vm152, %v111, %v151
    %vm154 = vcmask 1044484
    %v155 = vsel %vm154, %v118, %v153
    %vm156 = vcmask 1045509
    %v157 = vsel %vm156, %v125, %v155
    %vm158 = vcmask 1046534
    %v159 = vsel %vm158, %v132, %v157
    %vm160 = vcmask 1047559
    %v161 = vsel %vm160, %v139, %v159
    %v163 = vadd.f32 %v74, %v161
    %164 = vst.msk [vmem:[#allocation2] sm:$0xff] %vm83, %v163
    // Predicated region
    $region46: #{tpu_custom_call.1} parent=1 // pred_check
      %p165 = pneg %p68
    $region47: #{tpu_custom_call.1} parent=1 // pred_check_branch
      %167 = sbr.rel (%p165) target = $region49
    $region48: #{tpu_custom_call.1} parent=1 // pred_region
      %v168 = vld [vmem:[#allocation2] sm:$0xff]
      %v169 = vmul.f32 %v168, 0.125
      %v170 = vld [vmem:[#allocation6] sm:$0xff]
      %v171 = vld [vmem:[#allocation6 + $0x8] sm:$0xff]
      %v172 = vld [vmem:[#allocation6 + $0x10] sm:$0xff]
      %v173 = vld [vmem:[#allocation6 + $0x18] sm:$0xff]
      %v174 = vld [vmem:[%s2] sm:$0x1]
      %v176 = vlaneseq
      %v177 = vshrl.u32 %v176, 7
      %v178 = vsub.s32 0, %v177
      %v179 = vrot.slane %v174, %v178
      %v182 = vsel %vm83, %v169, 0
      %184 = vmatprep.subr.mxu0 0.0
      %185 = vmatpush1.msra.mxu0 %v170
      %186 = vmatprep.subr.mxu0 0.0
      %187 = vmatpush1.msra.mxu0 %v171
      %188 = vmatprep.subr.mxu0 0.0
      %189 = vmatpush1.msra.mxu0 %v172
      %190 = vmatprep.subr.mxu0 0.0
      %191 = vmatpush1.msra.mxu0 %v173
      %192 = vmatprep.subr.mxu0 0.0
      %193 = vmatpush1.msra.mxu0 0.0
      %194 = vmatprep.subr.mxu0 0.0
      %195 = vmatpush1.msra.mxu0 0.0
      %196 = vmatprep.subr.mxu0 0.0
      %197 = vmatpush1.msra.mxu0 0.0
      %198 = vmatprep.subr.mxu0 0.0
      %199 = vmatpush1.msra.mxu0 0.0
      %200 = vmatprep.subr.mxu0 0.0
      %201 = vmatpush1.msra.mxu0 0.0
      %202 = vmatprep.subr.mxu0 0.0
      %203 = vmatpush1.msra.mxu0 0.0
      %204 = vmatprep.subr.mxu0 0.0
      %205 = vmatpush1.msra.mxu0 0.0
      %206 = vmatprep.subr.mxu0 0.0
      %207 = vmatpush1.msra.mxu0 0.0
      %208 = vmatprep.subr.mxu0 0.0
      %209 = vmatpush1.msra.mxu0 0.0
      %210 = vmatprep.subr.mxu0 0.0
      %211 = vmatpush1.msra.mxu0 0.0
      %212 = vmatprep.subr.mxu0 0.0
      %213 = vmatpush1.msra.mxu0 0.0
      %214 = vmatprep.subr.mxu0 0.0
      %215 = vmatpush1.msra.mxu0 0.0
      %216 = vmatprep.subr.mxu0 0.0
      %217 = vmatpush1.msra.mxu0 0.0
      %218 = vmatprep.subr.mxu0 0.0
      %219 = vmatpush1.msra.mxu0 0.0
      %220 = vmatprep.subr.mxu0 0.0
      %221 = vmatpush1.msra.mxu0 0.0
      %222 = vmatprep.subr.mxu0 0.0
      %223 = vmatpush1.msra.mxu0 0.0
      %224 = vmatprep.subr.mxu0 0.0
      %225 = vmatpush1.msra.mxu0 0.0
      %226 = vmatprep.subr.mxu0 0.0
      %227 = vmatpush1.msra.mxu0 0.0
      %228 = vmatprep.subr.mxu0 0.0
      %229 = vmatpush1.msra.mxu0 0.0
      %230 = vmatprep.subr.mxu0 0.0
      %231 = vmatpush1.msra.mxu0 0.0
      %232 = vmatprep.subr.mxu0 0.0
      %233 = vmatpush1.msra.mxu0 0.0
      %234 = vmatprep.subr.mxu0 0.0
      %235 = vmatpush1.msra.mxu0 0.0
      %236 = vmatprep.subr.mxu0 0.0
      %237 = vmatpush1.msra.mxu0 0.0
      %238 = vmatprep.subr.mxu0 0.0
      %239 = vmatpush1.msra.mxu0 0.0
      %240 = vmatprep.subr.mxu0 0.0
      %241 = vmatpush1.msra.mxu0 0.0
      %242 = vmatprep.subr.mxu0 0.0
      %243 = vmatpush1.msra.mxu0 0.0
      %244 = vmatprep.subr.mxu0 0.0
      %245 = vmatpush1.msra.mxu0 0.0
      %246 = vmatprep.subr.mxu0 0.0
      %247 = vmatpush1.msra.mxu0 0.0
      %248 = vmatprep.mubr.f32.mxu0 0.0
      %249 = vmatmul.mubr.f32.gmra.mrb[0].mxu0 %v182
      %v250 = vpop.f32.mrb[0].mxu0
      %v251 = vadd.f32 %v179, %v250
      %v252 = vpop.f32.mrb[0].mxu0
      %253 = vdwg.mxu0
      %v254 = vsel %vm83, %v251, 0.0
      %255 = vadd.xlane.f32.xlu0 %v254
      %v256 = vpop.xlane.xlu0 %255
      %v257 = vrcp.pop 32.0
      %v258 = vmul.f32 %v256, %v257
      %v259 = vsub.f32 %v251, %v258
      %v260 = vmul.f32 %v259, %v259
      %v261 = vsel %vm83, %v260, 0.0
      %262 = vadd.xlane.f32.xlu0 %v261
      %v263 = vpop.xlane.xlu0 %262
      %v264 = vmul.f32 %v263, %v257
      %v265 = vadd.f32 %v264, 1e-05
      %v266 = vrsqrt.pop %v265
      %v267 = vmul.f32 %v259, %v266
      %v268 = vld [vmem:[%s3] sm:$0x1]
      %v270 = vlaneseq
      %v271 = vshrl.u32 %v270, 7
      %v272 = vsub.s32 0, %v271
      %v273 = vrot.slane %v268, %v272
      %v275 = vmul.f32 %v267, %v273
      %v276 = vld [vmem:[%s4] sm:$0x1]
      %v278 = vlaneseq
      %v279 = vshrl.u32 %v278, 7
      %v280 = vsub.s32 0, %v279
      %v281 = vrot.slane %v276, %v280
      %v283 = vadd.f32 %v275, %v281
      %v284 = vmul.f32 %v283, 0.5
      %v285 = vmul.f32 %v283, 0.70710677
      %v286 = verf.f32.pop %v285
      %v287 = vadd.f32 %v286, 1.0
      %v288 = vmul.f32 %v284, %v287
      %v289 = vld [vmem:[#allocation8] sm:$0xff]
      %v290 = vld [vmem:[#allocation8 + $0x8] sm:$0xff]
      %v291 = vld [vmem:[#allocation8 + $0x10] sm:$0xff]
      %v292 = vld [vmem:[#allocation8 + $0x18] sm:$0xff]
      %v293 = vld [vmem:[%s6] sm:$0x1]
      %v295 = vlaneseq
      %v296 = vshrl.u32 %v295, 7
      %v297 = vsub.s32 0, %v296
      %v298 = vrot.slane %v293, %v297
      %v301 = vsel %vm83, %v288, 0
      %303 = vmatprep.subr.mxu0 0.0
      %304 = vmatpush1.msra.mxu0 %v289
      %305 = vmatprep.subr.mxu0 0.0
      %306 = vmatpush1.msra.mxu0 %v290
      %307 = vmatprep.subr.mxu0 0.0
      %308 = vmatpush1.msra.mxu0 %v291
      %309 = vmatprep.subr.mxu0 0.0
      %310 = vmatpush1.msra.mxu0 %v292
      %311 = vmatprep.subr.mxu0 0.0
      %312 = vmatpush1.msra.mxu0 0.0
      %313 = vmatprep.subr.mxu0 0.0
      %314 = vmatpush1.msra.mxu0 0.0
      %315 = vmatprep.subr.mxu0 0.0
      %316 = vmatpush1.msra.mxu0 0.0
      %317 = vmatprep.subr.mxu0 0.0
      %318 = vmatpush1.msra.mxu0 0.0
      %319 = vmatprep.subr.mxu0 0.0
      %320 = vmatpush1.msra.mxu0 0.0
      %321 = vmatprep.subr.mxu0 0.0
      %322 = vmatpush1.msra.mxu0 0.0
      %323 = vmatprep.subr.mxu0 0.0
      %324 = vmatpush1.msra.mxu0 0.0
      %325 = vmatprep.subr.mxu0 0.0
      %326 = vmatpush1.msra.mxu0 0.0
      %327 = vmatprep.subr.mxu0 0.0
      %328 = vmatpush1.msra.mxu0 0.0
      %329 = vmatprep.subr.mxu0 0.0
      %330 = vmatpush1.msra.mxu0 0.0
      %331 = vmatprep.subr.mxu0 0.0
      %332 = vmatpush1.msra.mxu0 0.0
      %333 = vmatprep.subr.mxu0 0.0
      %334 = vmatpush1.msra.mxu0 0.0
      %335 = vmatprep.subr.mxu0 0.0
      %336 = vmatpush1.msra.mxu0 0.0
      %337 = vmatprep.subr.mxu0 0.0
      %338 = vmatpush1.msra.mxu0 0.0
      %339 = vmatprep.subr.mxu0 0.0
      %340 = vmatpush1.msra.mxu0 0.0
      %341 = vmatprep.subr.mxu0 0.0
      %342 = vmatpush1.msra.mxu0 0.0
      %343 = vmatprep.subr.mxu0 0.0
      %344 = vmatpush1.msra.mxu0 0.0
      %345 = vmatprep.subr.mxu0 0.0
      %346 = vmatpush1.msra.mxu0 0.0
      %347 = vmatprep.subr.mxu0 0.0
      %348 = vmatpush1.msra.mxu0 0.0
      %349 = vmatprep.subr.mxu0 0.0
      %350 = vmatpush1.msra.mxu0 0.0
      %351 = vmatprep.subr.mxu0 0.0
      %352 = vmatpush1.msra.mxu0 0.0
      %353 = vmatprep.subr.mxu0 0.0
      %354 = vmatpush1.msra.mxu0 0.0
      %355 = vmatprep.subr.mxu0 0.0
      %356 = vmatpush1.msra.mxu0 0.0
      %357 = vmatprep.subr.mxu0 0.0
      %358 = vmatpush1.msra.mxu0 0.0
      %359 = vmatprep.subr.mxu0 0.0
      %360 = vmatpush1.msra.mxu0 0.0
      %361 = vmatprep.subr.mxu0 0.0
      %362 = vmatpush1.msra.mxu0 0.0
      %363 = vmatprep.subr.mxu0 0.0
      %364 = vmatpush1.msra.mxu0 0.0
      %365 = vmatprep.subr.mxu0 0.0
      %366 = vmatpush1.msra.mxu0 0.0
      %367 = vmatprep.mubr.f32.mxu0 0.0
      %368 = vmatmul.mubr.f32.gmra.mrb[0].mxu0 %v301
      %v369 = vpop.f32.mrb[0].mxu0
      %v370 = vadd.f32 %v298, %v369
      %v371 = vpop.f32.mrb[0].mxu0
      %372 = vdwg.mxu0
      %373 = vst [vmem:[#allocation9] sm:$0xff] %v370
    $region49: #{tpu_custom_call.1} parent=1 // pred_fallthru
      _
    // Predicated region
    $region50: #{tpu_custom_call.1} parent=1 // pred_check
      _
    $region51: #{tpu_custom_call.1} parent=1 // pred_check_branch
      %375 = sbr.rel (0) target = $region53
    $region52: #{tpu_custom_call.1} parent=1 // pred_region
      %s377 = ssub.s32 128, 128
      %378 = vsyncadd [#allocation5], %s377
      %s380 = sshll.u32 [#allocation9], 4
      %s381 = int_to_ptr.vmem [resolvable:$true] %s380
      %383 = dma.vmem_to_hbm [thread:$0]  %s381, 128, %s7, [#allocation5]
    $region53: #{tpu_custom_call.1} parent=1 // pred_fallthru
      _
    // Predicated region
    $region54: #{tpu_custom_call.1} parent=1 // pred_check
      _
    $region55: #{tpu_custom_call.1} parent=1 // pred_check_branch
      %385 = sbr.rel (0) target = $region57
    $region56: #{tpu_custom_call.1} parent=1 // pred_region
      %386 = dma.done [#allocation5], 128
    $region57: #{tpu_custom_call.1} parent=1 // pred_fallthru
      _
    %387 = vsyncpa [#allocation4], 1
    %388 = vsyncpa [#allocation7], 1
    %389 = vsyncpa [#allocation5], 1

</llo_original>
